<compile_context>
chip_gen: v7x
topology: tpu7x:2x2x1
jax: 0.10.0
libtpu: 0.0.40
codegen_flags: <defaults>
</compile_context>

<pallas_src>
import functools

import jax
import jax.numpy as jnp
from jax.experimental import pallas as pl
from jax.experimental.pallas import tpu as pltpu


def _round_up(x, m):
    return ((x + m - 1) // m) * m


def _make_mlp_kernel(num_hidden):
    """Fused MLP kernel: `num_hidden` ReLU layers + output layer + log_softmax.

    Operand refs:
      x_ref       [TB, F]          bf16  activations tile (pre-cast in wrapper)
      w_first_ref [F, H]           bf16  first hidden layer (padded cols)
      w_rest_ref  [num_hidden,H,H] bf16  remaining hidden layers + output layer
      b_ref       [num_hidden+1,H] f32   biases; output-layer pad lanes = -1e30
      out_ref     [TB, H]          bf16  padded log-probs (lane-dense store)
    """

    def kernel(x_ref, w_first_ref, w_rest_ref, b_ref, out_ref):
        # First hidden layer: bf16 matmul on the MXU, f32 accumulate/bias/relu.
        h = jnp.dot(
            x_ref[...], w_first_ref[...], preferred_element_type=jnp.float32
        )
        h = jnp.maximum(h + b_ref[pl.ds(0, 1), :], 0.0)

        # Remaining hidden layers (static unroll; hidden_layer is a Python int).
        for i in range(1, num_hidden):
            h = jnp.dot(
                h.astype(jnp.bfloat16),
                w_rest_ref[i - 1],
                preferred_element_type=jnp.float32,
            )
            h = jnp.maximum(h + b_ref[pl.ds(i, 1), :], 0.0)

        # Output layer (no activation). The padded weight columns are zero and
        # the padded bias lanes are -1e30, so the pad-lane mask comes for free.
        logits = jnp.dot(
            h.astype(jnp.bfloat16),
            w_rest_ref[num_hidden - 1],
            preferred_element_type=jnp.float32,
        )
        logits = logits + b_ref[pl.ds(num_hidden, 1), :]

        # log_softmax in f32; padded lanes contribute exp(-huge) = 0.
        m = jnp.max(logits, axis=-1, keepdims=True)
        z = logits - m
        lse = jnp.log(jnp.sum(jnp.exp(z), axis=-1, keepdims=True))
        out_ref[...] = (z - lse).astype(out_ref.dtype)

    return kernel


def prepare_params(params):
    """Pack (W, b) pairs into the kernel's padded/stacked bf16+f32 layout.

    params: [(W [in, out] f32, b [out] f32)] — the used hidden layers then the
            output layer (PyTorch weights pre-transposed to [in, out]).
    Returns (w_first [F, H] bf16, w_rest [L-1, H, H] bf16, b_all [L, H] f32)
    where H = max out-dim rounded up to 128 lanes. Zero padding is inert through
    ReLU; the output layer's padded bias lanes are set to -1e30 so the padded
    logits are masked without any in-kernel select.
    """
    H = max(_round_up(w.shape[1], 128) for w, _ in params)

    def pad_w(w, rows, cols):
        return jnp.pad(w, ((0, rows - w.shape[0]), (0, cols - w.shape[1])))

    f_in = params[0][0].shape[0]
    w_first = pad_w(params[0][0], f_in, H).astype(jnp.bfloat16)
    w_rest = jnp.stack(
        [pad_w(w, H, H).astype(jnp.bfloat16) for w, _ in params[1:]]
    )
    b_all = jnp.stack(
        [jnp.pad(b.reshape(-1), (0, H - b.shape[-1])) for _, b in params]
    ).astype(jnp.float32)

    # Bake the output-lane mask into the output-layer bias.
    n_out = params[-1][1].shape[-1]
    b_all = b_all.at[-1, n_out:].set(-1e30)
    return w_first, w_rest, b_all


def net_forward_pallas(x, packed, n_out, *, tile_b=None, out_dtype=jnp.bfloat16):
    """Fused Net forward as one batch-tiled Pallas call.

    x:      [B, n_feature] f32
    packed: output of prepare_params
    n_out:  true (unpadded) number of classes
    """
    w_first, w_rest, b_all = packed
    batch, n_feature = x.shape
    num_layers = b_all.shape[0]
    num_hidden = num_layers - 1
    h_pad = b_all.shape[1]

    # Tile selection: aim for a 2-step grid (2-4 for very large batches) so the
    # ~0.35 us per-step overhead is amortized while grid >= 2 keeps both v7x
    # TensorCores busy (dimension_semantics=("parallel",)). Per-step VMEM is
    # ~1-3 MiB — far under the limit on every generation.
    b8 = _round_up(batch, 8)
    if tile_b is None:
        if b8 <= 16:
            tile_b = b8                                  # too small to split
        elif b8 <= 2048:
            tile_b = _round_up((b8 + 1) // 2, 8)         # grid of 2
        else:
            tile_b = 1024                                # grid of ceil(B/1024)
    tile_b = max(8, _round_up(min(tile_b, b8), 8))

    b_padded = _round_up(batch, tile_b)
    if b_padded != batch:
        x = jnp.pad(x, ((0, b_padded - batch), (0, 0)))

    # Pre-cast activations to bf16 once in XLA: halves the x DMA and removes
    # per-tile converts; accumulation stays f32 via preferred_element_type.
    x = x.astype(jnp.bfloat16)

    kernel = _make_mlp_kernel(num_hidden)

    out = pl.pallas_call(
        kernel,
        out_shape=jax.ShapeDtypeStruct((b_padded, h_pad), out_dtype),
        grid=(b_padded // tile_b,),
        in_specs=[
            # activation tile streams with the grid
            pl.BlockSpec((tile_b, n_feature), lambda i: (i, 0)),
            # weights / biases: constant block index -> VMEM-resident, DMA'd once
            pl.BlockSpec(w_first.shape, lambda i: (0, 0)),
            pl.BlockSpec(w_rest.shape, lambda i: (0, 0, 0)),
            pl.BlockSpec(b_all.shape, lambda i: (0, 0)),
        ],
        out_specs=pl.BlockSpec((tile_b, h_pad), lambda i: (i, 0)),
        compiler_params=pltpu.CompilerParams(
            dimension_semantics=("parallel",),  # shards batch tiles across TCs
        ),
    )(x, w_first, w_rest, b_all)

    return out[:batch, :n_out]


def net_forward_ref(x, params):
    """Pure-JAX f32 reference of the module's forward (for correctness)."""
    h = x
    for w, b in params[:-1]:
        h = jnp.maximum(h @ w + b, 0.0)
    wo, bo = params[-1]
    return jax.nn.log_softmax(h @ wo + bo, axis=1)


def init_params(key, n_feature, hidden_sizes, hidden_layer, n_out):
    """PyTorch-Linear-style init: W [in, out], b [out], U(-1/sqrt(fan_in), ...).

    Returns the `hidden_layer` hidden layers actually used in the forward,
    followed by the output layer (whose fan-in matches the module's __init__).
    """
    dims = [n_feature] + list(hidden_sizes[:hidden_layer])
    params = []
    for i in range(hidden_layer):
        fan_in, fan_out = dims[i], dims[i + 1]
        key, kw, kb = jax.random.split(key, 3)
        bound = 1.0 / float(fan_in) ** 0.5
        w = jax.random.uniform(kw, (fan_in, fan_out), jnp.float32, -bound, bound)
        b = jax.random.uniform(kb, (fan_out,), jnp.float32, -bound, bound)
        params.append((w, b))
    fan_in = dims[hidden_layer]
    key, kw, kb = jax.random.split(key, 3)
    bound = 1.0 / float(fan_in) ** 0.5
    wo = jax.random.uniform(kw, (fan_in, n_out), jnp.float32, -bound, bound)
    bo = jax.random.uniform(kb, (n_out,), jnp.float32, -bound, bound)
    params.append((wo, bo))
    return params


if __name__ == "__main__":
    # Small shapes consistent with the module; batch chosen so the grid has 2
    # parallel steps (tile_b = 128).
    batch = 256
    n_feature = 32
    n_hidden, n_hidden1, n_hidden2, n_hidden3 = 32, 24, 16, 16
    n_out = 8
    hidden_layer = 4  # static, like the PyTorch forward argument

    key = jax.random.PRNGKey(0)
    key, kx = jax.random.split(key)
    x = jax.random.normal(kx, (batch, n_feature), jnp.float32)

    params = init_params(
        key, n_feature, (n_hidden, n_hidden1, n_hidden2, n_hidden3),
        hidden_layer, n_out,
    )
    packed = prepare_params(params)

    fwd = jax.jit(functools.partial(net_forward_pallas, n_out=n_out))
    out = jax.block_until_ready(fwd(x, packed))

    ref = net_forward_ref(x, params)
    assert out.shape == (batch, n_out)

    # bf16 matmuls + bf16 log-prob output (f32 accumulate) -> relaxed tolerance.
    out_f32 = out.astype(jnp.float32)
    assert jnp.allclose(out_f32, ref, atol=4e-2, rtol=4e-2), "mismatch vs JAX reference"
    # log-probs must normalize (bf16 output -> ~1% tolerance on the sum).
    assert jnp.allclose(jnp.sum(jnp.exp(out_f32), axis=1), 1.0, atol=3e-2)

    print("KERNEL_OK")
</pallas_src>

<mosaic_0001>
module attributes {stable_mosaic.version = 11 : i64} {
  func.func @kernel(%arg0: i32, %arg1: memref<128x32xbf16, #tpu.memory_space<vmem>>, %arg2: memref<32x128xbf16, #tpu.memory_space<vmem>>, %arg3: memref<4x128x128xbf16, #tpu.memory_space<vmem>>, %arg4: memref<5x128xf32, #tpu.memory_space<vmem>>, %arg5: memref<128x128xbf16, #tpu.memory_space<vmem>>) attributes {dimension_semantics = [#tpu.dimension_semantics<parallel>], iteration_bounds = array<i64: 2>, scalar_prefetch = 0 : i64, scratch_operands = 0 : i64, tpu.core_type = #tpu.core_type<tc>, window_params = [{transform_indices = @transform_0, window_bounds = array<i64: 128, 32>}, {pipeline_mode = #tpu.pipeline_mode<synchronous>, transform_indices = @transform_1, window_bounds = array<i64: 32, 128>}, {pipeline_mode = #tpu.pipeline_mode<synchronous>, transform_indices = @transform_2, window_bounds = array<i64: 4, 128, 128>}, {pipeline_mode = #tpu.pipeline_mode<synchronous>, transform_indices = @transform_3, window_bounds = array<i64: 5, 128>}, {transform_indices = @transform_4, window_bounds = array<i64: 128, 128>}]} {
    %c0 = arith.constant 0 : index
    %c0_0 = arith.constant 0 : index
    %0 = vector.load %arg1[%c0, %c0_0] : memref<128x32xbf16, #tpu.memory_space<vmem>>, vector<128x32xbf16>
    %c0_1 = arith.constant 0 : index
    %c0_2 = arith.constant 0 : index
    %1 = vector.load %arg2[%c0_1, %c0_2] : memref<32x128xbf16, #tpu.memory_space<vmem>>, vector<32x128xbf16>
    %cst = arith.constant dense<0.000000e+00> : vector<128x128xf32>
    %2 = tpu.matmul %0, %1, %cst {dimension_numbers = #tpu.dot_dimension_numbers<[1], [0], [0], [1], [0, 0, 1, 1], [], []>} : vector<128x32xbf16>, vector<32x128xbf16>, vector<128x128xf32> -> vector<128x128xf32>
    %c0_3 = arith.constant 0 : index
    %c0_4 = arith.constant 0 : index
    %3 = vector.load %arg4[%c0_3, %c0_4] : memref<5x128xf32, #tpu.memory_space<vmem>>, vector<1x128xf32>
    %4 = vector.broadcast %3 : vector<1x128xf32> to vector<128x128xf32>
    %5 = arith.addf %2, %4 : vector<128x128xf32>
    %cst_5 = arith.constant 0.000000e+00 : f32
    %6 = vector.broadcast %cst_5 : f32 to vector<128x128xf32>
    %7 = arith.maximumf %5, %6 : vector<128x128xf32>
    %8 = arith.truncf %7 : vector<128x128xf32> to vector<128x128xbf16>
    %c0_6 = arith.constant 0 : index
    %c0_7 = arith.constant 0 : index
    %c0_8 = arith.constant 0 : index
    %9 = vector.load %arg3[%c0_6, %c0_7, %c0_8] : memref<4x128x128xbf16, #tpu.memory_space<vmem>>, vector<1x128x128xbf16>
    %10 = vector.shape_cast %9 : vector<1x128x128xbf16> to vector<128x128xbf16>
    %cst_9 = arith.constant dense<0.000000e+00> : vector<128x128xf32>
    %11 = tpu.matmul %8, %10, %cst_9 {dimension_numbers = #tpu.dot_dimension_numbers<[1], [0], [0], [1], [0, 0, 1, 1], [], []>} : vector<128x128xbf16>, vector<128x128xbf16>, vector<128x128xf32> -> vector<128x128xf32>
    %c1 = arith.constant 1 : index
    %c0_10 = arith.constant 0 : index
    %12 = vector.load %arg4[%c1, %c0_10] : memref<5x128xf32, #tpu.memory_space<vmem>>, vector<1x128xf32>
    %13 = vector.broadcast %12 : vector<1x128xf32> to vector<128x128xf32>
    %14 = arith.addf %11, %13 : vector<128x128xf32>
    %cst_11 = arith.constant 0.000000e+00 : f32
    %15 = vector.broadcast %cst_11 : f32 to vector<128x128xf32>
    %16 = arith.maximumf %14, %15 : vector<128x128xf32>
    %17 = arith.truncf %16 : vector<128x128xf32> to vector<128x128xbf16>
    %c1_12 = arith.constant 1 : index
    %c0_13 = arith.constant 0 : index
    %c0_14 = arith.constant 0 : index
    %18 = vector.load %arg3[%c1_12, %c0_13, %c0_14] : memref<4x128x128xbf16, #tpu.memory_space<vmem>>, vector<1x128x128xbf16>
    %19 = vector.shape_cast %18 : vector<1x128x128xbf16> to vector<128x128xbf16>
    %cst_15 = arith.constant dense<0.000000e+00> : vector<128x128xf32>
    %20 = tpu.matmul %17, %19, %cst_15 {dimension_numbers = #tpu.dot_dimension_numbers<[1], [0], [0], [1], [0, 0, 1, 1], [], []>} : vector<128x128xbf16>, vector<128x128xbf16>, vector<128x128xf32> -> vector<128x128xf32>
    %c2 = arith.constant 2 : index
    %c0_16 = arith.constant 0 : index
    %21 = vector.load %arg4[%c2, %c0_16] : memref<5x128xf32, #tpu.memory_space<vmem>>, vector<1x128xf32>
    %22 = vector.broadcast %21 : vector<1x128xf32> to vector<128x128xf32>
    %23 = arith.addf %20, %22 : vector<128x128xf32>
    %cst_17 = arith.constant 0.000000e+00 : f32
    %24 = vector.broadcast %cst_17 : f32 to vector<128x128xf32>
    %25 = arith.maximumf %23, %24 : vector<128x128xf32>
    %26 = arith.truncf %25 : vector<128x128xf32> to vector<128x128xbf16>
    %c2_18 = arith.constant 2 : index
    %c0_19 = arith.constant 0 : index
    %c0_20 = arith.constant 0 : index
    %27 = vector.load %arg3[%c2_18, %c0_19, %c0_20] : memref<4x128x128xbf16, #tpu.memory_space<vmem>>, vector<1x128x128xbf16>
    %28 = vector.shape_cast %27 : vector<1x128x128xbf16> to vector<128x128xbf16>
    %cst_21 = arith.constant dense<0.000000e+00> : vector<128x128xf32>
    %29 = tpu.matmul %26, %28, %cst_21 {dimension_numbers = #tpu.dot_dimension_numbers<[1], [0], [0], [1], [0, 0, 1, 1], [], []>} : vector<128x128xbf16>, vector<128x128xbf16>, vector<128x128xf32> -> vector<128x128xf32>
    %c3 = arith.constant 3 : index
    %c0_22 = arith.constant 0 : index
    %30 = vector.load %arg4[%c3, %c0_22] : memref<5x128xf32, #tpu.memory_space<vmem>>, vector<1x128xf32>
    %31 = vector.broadcast %30 : vector<1x128xf32> to vector<128x128xf32>
    %32 = arith.addf %29, %31 : vector<128x128xf32>
    %cst_23 = arith.constant 0.000000e+00 : f32
    %33 = vector.broadcast %cst_23 : f32 to vector<128x128xf32>
    %34 = arith.maximumf %32, %33 : vector<128x128xf32>
    %35 = arith.truncf %34 : vector<128x128xf32> to vector<128x128xbf16>
    %c3_24 = arith.constant 3 : index
    %c0_25 = arith.constant 0 : index
    %c0_26 = arith.constant 0 : index
    %36 = vector.load %arg3[%c3_24, %c0_25, %c0_26] : memref<4x128x128xbf16, #tpu.memory_space<vmem>>, vector<1x128x128xbf16>
    %37 = vector.shape_cast %36 : vector<1x128x128xbf16> to vector<128x128xbf16>
    %cst_27 = arith.constant dense<0.000000e+00> : vector<128x128xf32>
    %38 = tpu.matmul %35, %37, %cst_27 {dimension_numbers = #tpu.dot_dimension_numbers<[1], [0], [0], [1], [0, 0, 1, 1], [], []>} : vector<128x128xbf16>, vector<128x128xbf16>, vector<128x128xf32> -> vector<128x128xf32>
    %c4 = arith.constant 4 : index
    %c0_28 = arith.constant 0 : index
    %39 = vector.load %arg4[%c4, %c0_28] : memref<5x128xf32, #tpu.memory_space<vmem>>, vector<1x128xf32>
    %40 = vector.broadcast %39 : vector<1x128xf32> to vector<128x128xf32>
    %41 = arith.addf %38, %40 : vector<128x128xf32>
    %cst_29 = arith.constant dense<0xFF800000> : vector<128xf32>
    %42 = vector.multi_reduction <maximumf>, %41, %cst_29 [1] : vector<128x128xf32> to vector<128xf32>
    %43 = vector.shape_cast %42 : vector<128xf32> to vector<128x1xf32>
    %44 = vector.broadcast %43 : vector<128x1xf32> to vector<128x128xf32>
    %45 = arith.subf %41, %44 : vector<128x128xf32>
    %46 = math.exp %45 : vector<128x128xf32>
    %cst_30 = arith.constant dense<0.000000e+00> : vector<128xf32>
    %47 = vector.multi_reduction <add>, %46, %cst_30 [1] : vector<128x128xf32> to vector<128xf32>
    %48 = vector.shape_cast %47 : vector<128xf32> to vector<128x1xf32>
    %49 = math.log %48 : vector<128x1xf32>
    %50 = vector.broadcast %49 : vector<128x1xf32> to vector<128x128xf32>
    %51 = arith.subf %45, %50 : vector<128x128xf32>
    %52 = arith.truncf %51 : vector<128x128xf32> to vector<128x128xbf16>
    %c0_31 = arith.constant 0 : index
    %c0_32 = arith.constant 0 : index
    %53 = vector.load %arg5[%c0_31, %c0_32] : memref<128x128xbf16, #tpu.memory_space<vmem>>, vector<128x128xbf16>
    tpu.vector_store %arg5[%c0_31, %c0_32], %52 {strides = array<i32>} : memref<128x128xbf16, #tpu.memory_space<vmem>>, vector<128x128xbf16>,
    return
  }
  func.func @transform_0(%arg0: i32) -> (i32, i32) {
    %c0_i32 = arith.constant 0 : i32
    %c0_i32_0 = arith.constant 0 : i32
    return %arg0, %c0_i32 : i32, i32
  }
  func.func @transform_1(%arg0: i32) -> (i32, i32) {
    %c0_i32 = arith.constant 0 : i32
    %c0_i32_0 = arith.constant 0 : i32
    %c0_i32_1 = arith.constant 0 : i32
    return %c0_i32, %c0_i32_0 : i32, i32
  }
  func.func @transform_2(%arg0: i32) -> (i32, i32, i32) {
    %c0_i32 = arith.constant 0 : i32
    %c0_i32_0 = arith.constant 0 : i32
    %c0_i32_1 = arith.constant 0 : i32
    %c0_i32_2 = arith.constant 0 : i32
    return %c0_i32, %c0_i32_0, %c0_i32_1 : i32, i32, i32
  }
  func.func @transform_3(%arg0: i32) -> (i32, i32) {
    %c0_i32 = arith.constant 0 : i32
    %c0_i32_0 = arith.constant 0 : i32
    %c0_i32_1 = arith.constant 0 : i32
    return %c0_i32, %c0_i32_0 : i32, i32
  }
  func.func @transform_4(%arg0: i32) -> (i32, i32) {
    %c0_i32 = arith.constant 0 : i32
    %c0_i32_0 = arith.constant 0 : i32
    return %arg0, %c0_i32 : i32, i32
  }
}

</mosaic_0001>

<llo_original>
// kernel: net_forward_pallas.1
$region0: #{net_forward_pallas.1}
  #allocation0 [shape = 'u32[]', space=smem, size = 0x4, offset = 0x4, fixed_abs, tag = 'smem constant byte address 0x4 - core index']
  #allocation1 [shape = 'u32[144,128]{1,0:T(1,128)}', space=vmem, size = 0x12000, scoped, tag = 'internal scratch']
  %s0 = inlined_call_operand.vmem [shape: bf16[256,32], index: 0, kind: input, shape index: {}]
  %s1 = inlined_call_operand.hbm [shape: bf16[32,128], index: 1, kind: input, shape index: {}]
  %s2 = inlined_call_operand.vmem [shape: bf16[4,128,128], index: 2, kind: input, shape index: {}]
  %s3 = inlined_call_operand.vmem [shape: f32[5,128], index: 3, kind: input, shape index: {}]
  %s4 = inlined_call_operand.vmem [shape: bf16[256,128], index: 4, kind: output, shape index: {}]
  %s5 = sld [smem:[#allocation0]]
  $region53: #{net_forward_pallas.1} parent=0
    _
  %s7 = ssub.s32 1, %s5
  %s8 = scalar_select 0, %s7, %s5
  $region1: #{net_forward_pallas.1} parent=0
    #allocation2 [shape = 'u8[8192]{0}', space=vmem, size = 0x2000, scoped, tag = 'input window, operand 1, single buffered']
    #allocation3 [shape = 's32[2]{0}', space=sflag, size = 0x8, scoped, tag = 'scoped memory for net_forward_pallas.1']
    %9 = vsyncpa [#allocation3], 0
    loop: start=0, step=1, limit=4
    $region2: #{net_forward_pallas.1} parent=1 // loop_pre_header
      _
    $region3: #{net_forward_pallas.1} parent=1 // loop_header
      %s11 = sphi 0, %s15
      %p12 = scmp.ge.s32.totalorder %s11, 4
      %s21 = sphi 0, %s23
      %s24 = sphi 0, %s21
      %s25 = sphi 0, %s24
      %s41 = sphi 0, %s25
      %s45 = sphi 0, %s45
      %s47 = sphi 0, %s45
      %s48 = sphi 0, %s47
      %s62 = sphi 0, %s48
      %s66 = sphi 0, %s66
      %s68 = sphi 0, %s66
      %s69 = sphi 0, %s68
      %s83 = sphi 0, %s69
      %s87 = sphi 0, %s87
      %s89 = sphi 0, %s87
      %s90 = sphi 0, %s89
      %s104 = sphi 0, %s90
      %s110 = sphi 0, %s112
      %s113 = sphi 0, %s110
      %s114 = sphi 0, %s113
      %s130 = sphi 0, %s114
    $region4: #{net_forward_pallas.1} parent=1 // loop_header_branch
      %14 = sbr.rel (%p12) target = $region8
    $region5: #{net_forward_pallas.1} parent=1 // loop_body
      %s16 = ssub.s32 %s11, 1
      %s17 = ssub.s32 %s11, 2
      %s18 = sadd.s32 %s11, 1
      %s19 = ssub.s32 %s11, %s18
      %p20 = scmp.eq.s32.totalorder %s19, 0
      %s22 = sadd.s32 %s21, 1
      %s23 = scalar_select %p20, %s21, %s22
      %p26 = pneg %p20
      %p27 = scmp.eq.s32.totalorder %s11, 1
      %p28 = por %p26, %p27
      %p29 = scmp.ne.s32.totalorder %s21, %s24
      %p30 = scmp.eq.s32.totalorder %s11, 0
      %p31 = por %p29, %p30
      %p32 = scmp.ne.s32.totalorder %s21, %s24
      %p33 = scmp.eq.s32.totalorder %s16, 1
      %p34 = por %p32, %p33
      %p35 = scmp.ne.s32.totalorder %s24, %s25
      %p36 = scmp.eq.s32.totalorder %s16, 0
      %p37 = por %p35, %p36
      %p38 = scmp.ne.s32.totalorder %s24, %s25
      %p39 = scmp.eq.s32.totalorder %s17, 1
      %p40 = por %p38, %p39
      %p42 = scmp.ne.s32.totalorder %s25, %s41
      %p43 = scmp.eq.s32.totalorder %s17, 0
      %p44 = por %p42, %p43
      %s46 = sadd.s32 %s45, 1
      %p49 = scmp.eq.s32.totalorder %s11, 1
      %p50 = scmp.ne.s32.totalorder %s45, %s47
      %p51 = scmp.eq.s32.totalorder %s11, 0
      %p52 = por %p50, %p51
      %p53 = scmp.ne.s32.totalorder %s45, %s47
      %p54 = scmp.eq.s32.totalorder %s16, 1
      %p55 = por %p53, %p54
      %p56 = scmp.ne.s32.totalorder %s47, %s48
      %p57 = scmp.eq.s32.totalorder %s16, 0
      %p58 = por %p56, %p57
      %p59 = scmp.ne.s32.totalorder %s47, %s48
      %p60 = scmp.eq.s32.totalorder %s17, 1
      %p61 = por %p59, %p60
      %p63 = scmp.ne.s32.totalorder %s48, %s62
      %p64 = scmp.eq.s32.totalorder %s17, 0
      %p65 = por %p63, %p64
      %s67 = sadd.s32 %s66, 1
      %p70 = scmp.eq.s32.totalorder %s11, 1
      %p71 = scmp.ne.s32.totalorder %s66, %s68
      %p72 = scmp.eq.s32.totalorder %s11, 0
      %p73 = por %p71, %p72
      %p74 = scmp.ne.s32.totalorder %s66, %s68
      %p75 = scmp.eq.s32.totalorder %s16, 1
      %p76 = por %p74, %p75
      %p77 = scmp.ne.s32.totalorder %s68, %s69
      %p78 = scmp.eq.s32.totalorder %s16, 0
      %p79 = por %p77, %p78
      %p80 = scmp.ne.s32.totalorder %s68, %s69
      %p81 = scmp.eq.s32.totalorder %s17, 1
      %p82 = por %p80, %p81
      %p84 = scmp.ne.s32.totalorder %s69, %s83
      %p85 = scmp.eq.s32.totalorder %s17, 0
      %p86 = por %p84, %p85
      %s88 = sadd.s32 %s87, 1
      %p91 = scmp.eq.s32.totalorder %s11, 1
      %p92 = scmp.ne.s32.totalorder %s87, %s89
      %p93 = scmp.eq.s32.totalorder %s11, 0
      %p94 = por %p92, %p93
      %p95 = scmp.ne.s32.totalorder %s87, %s89
      %p96 = scmp.eq.s32.totalorder %s16, 1
      %p97 = por %p95, %p96
      %p98 = scmp.ne.s32.totalorder %s89, %s90
      %p99 = scmp.eq.s32.totalorder %s16, 0
      %p100 = por %p98, %p99
      %p101 = scmp.ne.s32.totalorder %s89, %s90
      %p102 = scmp.eq.s32.totalorder %s17, 1
      %p103 = por %p101, %p102
      %p105 = scmp.ne.s32.totalorder %s90, %s104
      %p106 = scmp.eq.s32.totalorder %s17, 0
      %p107 = por %p105, %p106
      %s108 = ssub.s32 %s11, %s18
      %p109 = scmp.eq.s32.totalorder %s108, 0
      %s111 = sadd.s32 %s110, 1
      %s112 = scalar_select %p109, %s110, %s111
      %p115 = pneg %p109
      %p116 = scmp.eq.s32.totalorder %s11, 1
      %p117 = por %p115, %p116
      %p118 = scmp.ne.s32.totalorder %s110, %s113
      %p119 = scmp.eq.s32.totalorder %s11, 0
      %p120 = por %p118, %p119
      %p121 = scmp.ne.s32.totalorder %s110, %s113
      %p122 = scmp.eq.s32.totalorder %s16, 1
      %p123 = por %p121, %p122
      %p124 = scmp.ne.s32.totalorder %s113, %s114
      %p125 = scmp.eq.s32.totalorder %s16, 0
      %p126 = por %p124, %p125
      %p127 = scmp.ne.s32.totalorder %s113, %s114
      %p128 = scmp.eq.s32.totalorder %s17, 1
      %p129 = por %p127, %p128
      %p131 = scmp.ne.s32.totalorder %s114, %s130
      %p132 = scmp.eq.s32.totalorder %s17, 0
      %p133 = por %p131, %p132
      %p134 = scmp.le.s32.totalorder 1, %s11
      %p135 = scmp.lt.s32.totalorder %s11, 3
      %p136 = pnand %p134, %p135
      %p137 = pneg %p136
      // Predicated region
      $region9: #{net_forward_pallas.1} parent=5 // pred_check
        _
      $region10: #{net_forward_pallas.1} parent=5 // pred_check_branch
        %139 = sbr.rel (%p136) target = $region12
      $region11: #{net_forward_pallas.1} parent=5 // pred_region
        %s140 = ssub.s32 %s11, 1
        // Predicated region
        $region13: #{net_forward_pallas.1} parent=11 // pred_check
          %p141 = pneg %p58
        $region14: #{net_forward_pallas.1} parent=11 // pred_check_branch
          %143 = sbr.rel (%p141) target = $region16
        $region15: #{net_forward_pallas.1} parent=11 // pred_region
          %s145 = ssub.s32 256, 256
          %146 = vsyncadd [#allocation3], %s145
          %s147 = sshll.u32 [#allocation2], 4
          %s148 = int_to_ptr.vmem [resolvable:$true] %s147
          %153 = dma.hbm_to_vmem [thread:$0]  %s1, 256, %s148, [#allocation3], 64, 64, 4
        $region16: #{net_forward_pallas.1} parent=11 // pred_fallthru
          _
        // Predicated region
        $region17: #{net_forward_pallas.1} parent=11 // pred_check
          %p154 = pneg %p79
        $region18: #{net_forward_pallas.1} parent=11 // pred_check_branch
          %156 = sbr.rel (%p154) target = $region20
        $region19: #{net_forward_pallas.1} parent=11 // pred_region
          _
        $region20: #{net_forward_pallas.1} parent=11 // pred_fallthru
          _
        // Predicated region
        $region21: #{net_forward_pallas.1} parent=11 // pred_check
          %p157 = pneg %p100
        $region22: #{net_forward_pallas.1} parent=11 // pred_check_branch
          %159 = sbr.rel (%p157) target = $region24
        $region23: #{net_forward_pallas.1} parent=11 // pred_region
          _
        $region24: #{net_forward_pallas.1} parent=11 // pred_fallthru
          _
      $region12: #{net_forward_pallas.1} parent=5 // pred_fallthru
        _
      %p160 = scmp.lt.s32.totalorder %s11, 2
      // Predicated region
      $region25: #{net_forward_pallas.1} parent=5 // pred_check
        %p161 = pneg %p160
      $region26: #{net_forward_pallas.1} parent=5 // pred_check_branch
        %163 = sbr.rel (%p161) target = $region28
      $region27: #{net_forward_pallas.1} parent=5 // pred_region
        // Predicated region
        $region29: #{net_forward_pallas.1} parent=27 // pred_check
          %p164 = pneg %p31
        $region30: #{net_forward_pallas.1} parent=27 // pred_check_branch
          %166 = sbr.rel (%p164) target = $region32
        $region31: #{net_forward_pallas.1} parent=27 // pred_region
          %s167 = smul.u32 16, %s11
          %p168 = scmp.lt.s32.totalorder %s167, 31
          %s169 = scalar_select %p168, %s167, 31
          %s170 = smul.addr %s169, 4
          %s171 = scalar_lea.vmem %s0, %s170
          %s172 = smul.u32 16, %s11
        $region32: #{net_forward_pallas.1} parent=27 // pred_fallthru
          _
      $region28: #{net_forward_pallas.1} parent=5 // pred_fallthru
        _
      %p173 = scmp.le.s32.totalorder 1, %s11
      %p174 = scmp.lt.s32.totalorder %s11, 3
      %p175 = pnand %p173, %p174
      %p176 = pneg %p175
      // Predicated region
      $region33: #{net_forward_pallas.1} parent=5 // pred_check
        _
      $region34: #{net_forward_pallas.1} parent=5 // pred_check_branch
        %178 = sbr.rel (%p175) target = $region36
      $region35: #{net_forward_pallas.1} parent=5 // pred_region
        %s179 = ssub.s32 %s11, 1
        // Predicated region
        $region37: #{net_forward_pallas.1} parent=35 // pred_check
          %p180 = pneg %p58
        $region38: #{net_forward_pallas.1} parent=35 // pred_check_branch
          %182 = sbr.rel (%p180) target = $region40
        $region39: #{net_forward_pallas.1} parent=35 // pred_region
          %183 = dma.done [#allocation3], 256
        $region40: #{net_forward_pallas.1} parent=35 // pred_fallthru
          _
        %s184 = smul.u32 16, %s16
        %p185 = scmp.lt.s32.totalorder %s184, 31
        %s186 = scalar_select %p185, %s184, 31
        %s187 = smul.addr %s186, 4
        %s188 = scalar_lea.vmem %s0, %s187
        %p189 = pneg %p37
        %p190 = pneg %p34
        %p191 = pneg %p58
        %p192 = pneg %p55
        %p193 = pneg %p79
        %p194 = pneg %p76
        %p195 = pneg %p100
        %p196 = pneg %p97
        %p197 = pneg %p126
        %p198 = pneg %p123
        %s199 = smul.u32 16, %s16
        %p200 = scmp.lt.s32.totalorder %s199, 31
        %s201 = scalar_select %p200, %s199, 31
        %s202 = smul.addr %s201, 4
        %s203 = scalar_lea.vmem %s4, %s202
        %s204 = smul.u32 16, %s16
        %p205 = scmp.lt.s32.totalorder %s204, 31
        %s206 = scalar_select %p205, %s204, 31
        %s207 = smul.addr %s206, 4
        %s208 = scalar_lea.vmem %s0, %s207
        %s209 = smul.u32 16, %s16
        %s210 = smul.u32 16, %s16
        %p211 = scmp.lt.s32.totalorder %s210, 31
        %s212 = scalar_select %p211, %s210, 31
        %s213 = smul.addr %s212, 4
        %s214 = scalar_lea.vmem %s4, %s213
        %s215 = smul.u32 16, %s16
        %v217 = vld [vmem:[%s208] sm:$0xf]
        %v218 = vld [vmem:[%s208 + $0x4] sm:$0xf]
        %v219 = vld [vmem:[%s208 + $0x8] sm:$0xf]
        %v220 = vld [vmem:[%s208 + $0xc] sm:$0xf]
        %v221 = vld [vmem:[%s208 + $0x10] sm:$0xf]
        %v222 = vld [vmem:[%s208 + $0x14] sm:$0xf]
        %v223 = vld [vmem:[%s208 + $0x18] sm:$0xf]
        %v224 = vld [vmem:[%s208 + $0x1c] sm:$0xf]
        %v225 = vld [vmem:[%s208 + $0x20] sm:$0xf]
        %v226 = vld [vmem:[%s208 + $0x24] sm:$0xf]
        %v227 = vld [vmem:[%s208 + $0x28] sm:$0xf]
        %v228 = vld [vmem:[%s208 + $0x2c] sm:$0xf]
        %v229 = vld [vmem:[%s208 + $0x30] sm:$0xf]
        %v230 = vld [vmem:[%s208 + $0x34] sm:$0xf]
        %v231 = vld [vmem:[%s208 + $0x38] sm:$0xf]
        %v232 = vld [vmem:[%s208 + $0x3c] sm:$0xf]
        %v233 = vld [vmem:[#allocation2] sm:$0xf]
        %v234 = vld [vmem:[#allocation2 + $0x4] sm:$0xf]
        %v235 = vld [vmem:[#allocation2 + $0x8] sm:$0xf]
        %v236 = vld [vmem:[#allocation2 + $0xc] sm:$0xf]
        %v237 = vld [vmem:[%s3] sm:$0x1]
        %v238 = vlaneseq
        %v239 = vshrl.u32 %v238, 7
        %v240 = vsub.s32 0, %v239
        %v241 = vrot.slane %v237, %v240
        %v258 = vunpack.c.l.b16 %v217
        %v259 = vunpack.c.l.b16 %v218
        %v260 = vunpack.c.l.b16 %v219
        %v261 = vunpack.c.l.b16 %v220
        %v262 = vunpack.c.l.b16 %v221
        %v263 = vunpack.c.l.b16 %v222
        %v264 = vunpack.c.l.b16 %v223
        %v265 = vunpack.c.l.b16 %v224
        %v266 = vunpack.c.l.b16 %v225
        %v267 = vunpack.c.l.b16 %v226
        %v268 = vunpack.c.l.b16 %v227
        %v269 = vunpack.c.l.b16 %v228
        %v270 = vunpack.c.l.b16 %v229
        %v271 = vunpack.c.l.b16 %v230
        %v272 = vunpack.c.l.b16 %v231
        %v273 = vunpack.c.l.b16 %v232
        %v274 = vpack.c.b16 %v259, %v258
        %v275 = vpack.c.b16 %v261, %v260
        %v276 = vpack.c.b16 %v263, %v262
        %v277 = vpack.c.b16 %v265, %v264
        %v278 = vpack.c.b16 %v267, %v266
        %v279 = vpack.c.b16 %v269, %v268
        %v280 = vpack.c.b16 %v271, %v270
        %v281 = vpack.c.b16 %v273, %v272
        %v286 = vunpack.c.l.b16 %v233
        %v287 = vunpack.c.l.b16 %v234
        %v288 = vunpack.c.l.b16 %v235
        %v289 = vunpack.c.l.b16 %v236
        %v290 = vpack.c.b16 %v287, %v286
        %v291 = vpack.c.b16 %v289, %v288
        %vm294 = vcmask 261120
        %v296 = vsel %vm294, %v274, 0
        %v299 = vsel %vm294, %v275, 0
        %v302 = vsel %vm294, %v276, 0
        %v305 = vsel %vm294, %v277, 0
        %v308 = vsel %vm294, %v278, 0
        %v311 = vsel %vm294, %v279, 0
        %v314 = vsel %vm294, %v280, 0
        %v317 = vsel %vm294, %v281, 0
        %319 = vmatprep.subr.bf16.mxu0 0
        %320 = vmatpush1.bf16.msra.mxu0 %v290
        %321 = vmatprep.subr.bf16.mxu0 0
        %322 = vmatpush1.bf16.msra.mxu0 %v291
        %323 = vmatprep.subr.bf16.mxu0 0
        %324 = vmatpush1.bf16.msra.mxu0 0
        %325 = vmatprep.subr.bf16.mxu0 0
        %326 = vmatpush1.bf16.msra.mxu0 0
        %327 = vmatprep.subr.bf16.mxu0 0
        %328 = vmatpush1.bf16.msra.mxu0 0
        %329 = vmatprep.subr.bf16.mxu0 0
        %330 = vmatpush1.bf16.msra.mxu0 0
        %331 = vmatprep.subr.bf16.mxu0 0
        %332 = vmatpush1.bf16.msra.mxu0 0
        %333 = vmatprep.subr.bf16.mxu0 0
        %334 = vmatpush1.bf16.msra.mxu0 0
        %335 = vmatprep.subr.bf16.mxu0 0
        %336 = vmatpush1.bf16.msra.mxu0 0
        %337 = vmatprep.subr.bf16.mxu0 0
        %338 = vmatpush1.bf16.msra.mxu0 0
        %339 = vmatprep.subr.bf16.mxu0 0
        %340 = vmatpush1.bf16.msra.mxu0 0
        %341 = vmatprep.subr.bf16.mxu0 0
        %342 = vmatpush1.bf16.msra.mxu0 0
        %343 = vmatprep.subr.bf16.mxu0 0
        %344 = vmatpush1.bf16.msra.mxu0 0
        %345 = vmatprep.subr.bf16.mxu0 0
        %346 = vmatpush1.bf16.msra.mxu0 0
        %347 = vmatprep.subr.bf16.mxu0 0
        %348 = vmatpush1.bf16.msra.mxu0 0
        %349 = vmatprep.subr.bf16.mxu0 0
        %350 = vmatpush1.bf16.msra.mxu0 0
        %351 = vmatprep.mubr.bf16.mxu0 0
        %352 = vmatmul.mubr.bf16.gmra.mrb[0].mxu0 %v296
        %v353 = vpop.f32.mrb[0].mxu0
        %v354 = vadd.f32 %v241, %v353
        %v355 = vpop.f32.mrb[0].mxu0
        %v356 = vpop.f32.mrb[0].mxu0
        %v357 = vadd.f32 %v241, %v356
        %v358 = vpop.f32.mrb[0].mxu0
        %359 = vmatprep.mubr.bf16.mxu0 0
        %360 = vmatmul.mubr.bf16.gmra.mrb[0].mxu0 %v299
        %v361 = vpop.f32.mrb[0].mxu0
        %v362 = vadd.f32 %v241, %v361
        %v363 = vpop.f32.mrb[0].mxu0
        %v364 = vpop.f32.mrb[0].mxu0
        %v365 = vadd.f32 %v241, %v364
        %v366 = vpop.f32.mrb[0].mxu0
        %367 = vmatprep.mubr.bf16.mxu0 0
        %368 = vmatmul.mubr.bf16.gmra.mrb[0].mxu0 %v302
        %v369 = vpop.f32.mrb[0].mxu0
        %v370 = vadd.f32 %v241, %v369
        %v371 = vpop.f32.mrb[0].mxu0
        %v372 = vpop.f32.mrb[0].mxu0
        %v373 = vadd.f32 %v241, %v372
        %v374 = vpop.f32.mrb[0].mxu0
        %375 = vmatprep.mubr.bf16.mxu0 0
        %376 = vmatmul.mubr.bf16.gmra.mrb[0].mxu0 %v305
        %v377 = vpop.f32.mrb[0].mxu0
        %v378 = vadd.f32 %v241, %v377
        %v379 = vpop.f32.mrb[0].mxu0
        %v380 = vpop.f32.mrb[0].mxu0
        %v381 = vadd.f32 %v241, %v380
        %v382 = vpop.f32.mrb[0].mxu0
        %383 = vmatprep.mubr.bf16.mxu0 0
        %384 = vmatmul.mubr.bf16.gmra.mrb[0].mxu0 %v308
        %v385 = vpop.f32.mrb[0].mxu0
        %v386 = vadd.f32 %v241, %v385
        %v387 = vpop.f32.mrb[0].mxu0
        %v388 = vpop.f32.mrb[0].mxu0
        %v389 = vadd.f32 %v241, %v388
        %v390 = vpop.f32.mrb[0].mxu0
        %391 = vmatprep.mubr.bf16.mxu0 0
        %392 = vmatmul.mubr.bf16.gmra.mrb[0].mxu0 %v311
        %v393 = vpop.f32.mrb[0].mxu0
        %v394 = vadd.f32 %v241, %v393
        %v395 = vpop.f32.mrb[0].mxu0
        %v396 = vpop.f32.mrb[0].mxu0
        %v397 = vadd.f32 %v241, %v396
        %v398 = vpop.f32.mrb[0].mxu0
        %399 = vmatprep.mubr.bf16.mxu0 0
        %400 = vmatmul.mubr.bf16.gmra.mrb[0].mxu0 %v314
        %v401 = vpop.f32.mrb[0].mxu0
        %v402 = vadd.f32 %v241, %v401
        %v403 = vpop.f32.mrb[0].mxu0
        %v404 = vpop.f32.mrb[0].mxu0
        %v405 = vadd.f32 %v241, %v404
        %v406 = vpop.f32.mrb[0].mxu0
        %407 = vmatprep.mubr.bf16.mxu0 0
        %408 = vmatmul.mubr.bf16.gmra.mrb[0].mxu0 %v317
        %v409 = vpop.f32.mrb[0].mxu0
        %v410 = vadd.f32 %v241, %v409
        %v411 = vpop.f32.mrb[0].mxu0
        %v412 = vpop.f32.mrb[0].mxu0
        %v413 = vadd.f32 %v241, %v412
        %v414 = vpop.f32.mrb[0].mxu0
        %415 = vdwg.mxu0
        %v416 = vmax.f32 %v354, 0.0
        %v417 = vmax.f32 %v357, 0.0
        %v418 = vmax.f32 %v362, 0.0
        %v419 = vmax.f32 %v365, 0.0
        %v420 = vmax.f32 %v370, 0.0
        %v421 = vmax.f32 %v373, 0.0
        %v422 = vmax.f32 %v378, 0.0
        %v423 = vmax.f32 %v381, 0.0
        %v424 = vmax.f32 %v386, 0.0
        %v425 = vmax.f32 %v389, 0.0
        %v426 = vmax.f32 %v394, 0.0
        %v427 = vmax.f32 %v397, 0.0
        %v428 = vmax.f32 %v402, 0.0
        %v429 = vmax.f32 %v405, 0.0
        %v430 = vmax.f32 %v410, 0.0
        %v431 = vmax.f32 %v413, 0.0
        %v432 = vpack.c.bf16 %v417, %v416
        %v433 = vpack.c.bf16 %v419, %v418
        %v434 = vpack.c.bf16 %v421, %v420
        %v435 = vpack.c.bf16 %v423, %v422
        %v436 = vpack.c.bf16 %v425, %v424
        %v437 = vpack.c.bf16 %v427, %v426
        %v438 = vpack.c.bf16 %v429, %v428
        %v439 = vpack.c.bf16 %v431, %v430
        %v440 = vld [vmem:[%s2] sm:$0xf]
        %v441 = vld [vmem:[%s2 + $0x4] sm:$0xf]
        %v442 = vld [vmem:[%s2 + $0x8] sm:$0xf]
        %v443 = vld [vmem:[%s2 + $0xc] sm:$0xf]
        %v444 = vld [vmem:[%s2 + $0x10] sm:$0xf]
        %v445 = vld [vmem:[%s2 + $0x14] sm:$0xf]
        %v446 = vld [vmem:[%s2 + $0x18] sm:$0xf]
        %v447 = vld [vmem:[%s2 + $0x1c] sm:$0xf]
        %v448 = vld [vmem:[%s2 + $0x20] sm:$0xf]
        %v449 = vld [vmem:[%s2 + $0x24] sm:$0xf]
        %v450 = vld [vmem:[%s2 + $0x28] sm:$0xf]
        %v451 = vld [vmem:[%s2 + $0x2c] sm:$0xf]
        %v452 = vld [vmem:[%s2 + $0x30] sm:$0xf]
        %v453 = vld [vmem:[%s2 + $0x34] sm:$0xf]
        %v454 = vld [vmem:[%s2 + $0x38] sm:$0xf]
        %v455 = vld [vmem:[%s2 + $0x3c] sm:$0xf]
        %v456 = vld [vmem:[%s3 + $0x1] sm:$0x1]
        %v457 = vlaneseq
        %v458 = vshrl.u32 %v457, 7
        %v459 = vsub.s32 0, %v458
        %v460 = vrot.slane %v456, %v459
        %v477 = vunpack.c.l.b16 %v440
        %v478 = vunpack.c.l.b16 %v441
        %v479 = vunpack.c.l.b16 %v442
        %v480 = vunpack.c.l.b16 %v443
        %v481 = vunpack.c.l.b16 %v444
        %v482 = vunpack.c.l.b16 %v445
        %v483 = vunpack.c.l.b16 %v446
        %v484 = vunpack.c.l.b16 %v447
        %v485 = vunpack.c.l.b16 %v448
        %v486 = vunpack.c.l.b16 %v449
        %v487 = vunpack.c.l.b16 %v450
        %v488 = vunpack.c.l.b16 %v451
        %v489 = vunpack.c.l.b16 %v452
        %v490 = vunpack.c.l.b16 %v453
        %v491 = vunpack.c.l.b16 %v454
        %v492 = vunpack.c.l.b16 %v455
        %v493 = vpack.c.b16 %v478, %v477
        %v494 = vpack.c.b16 %v480, %v479
        %v495 = vpack.c.b16 %v482, %v481
        %v496 = vpack.c.b16 %v484, %v483
        %v497 = vpack.c.b16 %v486, %v485
        %v498 = vpack.c.b16 %v488, %v487
        %v499 = vpack.c.b16 %v490, %v489
        %v500 = vpack.c.b16 %v492, %v491
        %509 = vmatprep.subr.bf16.mxu0 0
        %510 = vmatpush1.bf16.msra.mxu0 %v493
        %511 = vmatprep.subr.bf16.mxu0 0
        %512 = vmatpush1.bf16.msra.mxu0 %v494
        %513 = vmatprep.subr.bf16.mxu0 0
        %514 = vmatpush1.bf16.msra.mxu0 %v495
        %515 = vmatprep.subr.bf16.mxu0 0
        %516 = vmatpush1.bf16.msra.mxu0 %v496
        %517 = vmatprep.subr.bf16.mxu0 0
        %518 = vmatpush1.bf16.msra.mxu0 %v497
        %519 = vmatprep.subr.bf16.mxu0 0
        %520 = vmatpush1.bf16.msra.mxu0 %v498
        %521 = vmatprep.subr.bf16.mxu0 0
        %522 = vmatpush1.bf16.msra.mxu0 %v499
        %523 = vmatprep.subr.bf16.mxu0 0
        %524 = vmatpush1.bf16.msra.mxu0 %v500
        %525 = vmatprep.subr.bf16.mxu0 0
        %526 = vmatpush1.bf16.msra.mxu0 0
        %527 = vmatprep.subr.bf16.mxu0 0
        %528 = vmatpush1.bf16.msra.mxu0 0
        %529 = vmatprep.subr.bf16.mxu0 0
        %530 = vmatpush1.bf16.msra.mxu0 0
        %531 = vmatprep.subr.bf16.mxu0 0
        %532 = vmatpush1.bf16.msra.mxu0 0
        %533 = vmatprep.subr.bf16.mxu0 0
        %534 = vmatpush1.bf16.msra.mxu0 0
        %535 = vmatprep.subr.bf16.mxu0 0
        %536 = vmatpush1.bf16.msra.mxu0 0
        %537 = vmatprep.subr.bf16.mxu0 0
        %538 = vmatpush1.bf16.msra.mxu0 0
        %539 = vmatprep.subr.bf16.mxu0 0
        %540 = vmatpush1.bf16.msra.mxu0 0
        %541 = vmatprep.mubr.bf16.mxu0 0
        %542 = vmatmul.mubr.bf16.gmra.mrb[0].mxu0 %v432
        %v543 = vpop.f32.mrb[0].mxu0
        %v544 = vadd.f32 %v460, %v543
        %v545 = vpop.f32.mrb[0].mxu0
        %v546 = vpop.f32.mrb[0].mxu0
        %v547 = vadd.f32 %v460, %v546
        %v548 = vpop.f32.mrb[0].mxu0
        %549 = vmatprep.mubr.bf16.mxu0 0
        %550 = vmatmul.mubr.bf16.gmra.mrb[0].mxu0 %v433
        %v551 = vpop.f32.mrb[0].mxu0
        %v552 = vadd.f32 %v460, %v551
        %v553 = vpop.f32.mrb[0].mxu0
        %v554 = vpop.f32.mrb[0].mxu0
        %v555 = vadd.f32 %v460, %v554
        %v556 = vpop.f32.mrb[0].mxu0
        %557 = vmatprep.mubr.bf16.mxu0 0
        %558 = vmatmul.mubr.bf16.gmra.mrb[0].mxu0 %v434
        %v559 = vpop.f32.mrb[0].mxu0
        %v560 = vadd.f32 %v460, %v559
        %v561 = vpop.f32.mrb[0].mxu0
        %v562 = vpop.f32.mrb[0].mxu0
        %v563 = vadd.f32 %v460, %v562
        %v564 = vpop.f32.mrb[0].mxu0
        %565 = vmatprep.mubr.bf16.mxu0 0
        %566 = vmatmul.mubr.bf16.gmra.mrb[0].mxu0 %v435
        %v567 = vpop.f32.mrb[0].mxu0
        %v568 = vadd.f32 %v460, %v567
        %v569 = vpop.f32.mrb[0].mxu0
        %v570 = vpop.f32.mrb[0].mxu0
        %v571 = vadd.f32 %v460, %v570
        %v572 = vpop.f32.mrb[0].mxu0
        %573 = vmatprep.mubr.bf16.mxu0 0
        %574 = vmatmul.mubr.bf16.gmra.mrb[0].mxu0 %v436
        %v575 = vpop.f32.mrb[0].mxu0
        %v576 = vadd.f32 %v460, %v575
        %v577 = vpop.f32.mrb[0].mxu0
        %v578 = vpop.f32.mrb[0].mxu0
        %v579 = vadd.f32 %v460, %v578
        %v580 = vpop.f32.mrb[0].mxu0
        %581 = vmatprep.mubr.bf16.mxu0 0
        %582 = vmatmul.mubr.bf16.gmra.mrb[0].mxu0 %v437
        %v583 = vpop.f32.mrb[0].mxu0
        %v584 = vadd.f32 %v460, %v583
        %v585 = vpop.f32.mrb[0].mxu0
        %v586 = vpop.f32.mrb[0].mxu0
        %v587 = vadd.f32 %v460, %v586
        %v588 = vpop.f32.mrb[0].mxu0
        %589 = vmatprep.mubr.bf16.mxu0 0
        %590 = vmatmul.mubr.bf16.gmra.mrb[0].mxu0 %v438
        %v591 = vpop.f32.mrb[0].mxu0
        %v592 = vadd.f32 %v460, %v591
        %v593 = vpop.f32.mrb[0].mxu0
        %v594 = vpop.f32.mrb[0].mxu0
        %v595 = vadd.f32 %v460, %v594
        %v596 = vpop.f32.mrb[0].mxu0
        %597 = vmatprep.mubr.bf16.mxu0 0
        %598 = vmatmul.mubr.bf16.gmra.mrb[0].mxu0 %v439
        %v599 = vpop.f32.mrb[0].mxu0
        %v600 = vadd.f32 %v460, %v599
        %v601 = vpop.f32.mrb[0].mxu0
        %v602 = vpop.f32.mrb[0].mxu0
        %v603 = vadd.f32 %v460, %v602
        %v604 = vpop.f32.mrb[0].mxu0
        %605 = vdwg.mxu0
        %v606 = vmax.f32 %v544, 0.0
        %v607 = vmax.f32 %v547, 0.0
        %v608 = vmax.f32 %v552, 0.0
        %v609 = vmax.f32 %v555, 0.0
        %v610 = vmax.f32 %v560, 0.0
        %v611 = vmax.f32 %v563, 0.0
        %v612 = vmax.f32 %v568, 0.0
        %v613 = vmax.f32 %v571, 0.0
        %v614 = vmax.f32 %v576, 0.0
        %v615 = vmax.f32 %v579, 0.0
        %v616 = vmax.f32 %v584, 0.0
        %v617 = vmax.f32 %v587, 0.0
        %v618 = vmax.f32 %v592, 0.0
        %v619 = vmax.f32 %v595, 0.0
        %v620 = vmax.f32 %v600, 0.0
        %v621 = vmax.f32 %v603, 0.0
        %v622 = vpack.c.bf16 %v607, %v606
        %v623 = vpack.c.bf16 %v609, %v608
        %v624 = vpack.c.bf16 %v611, %v610
        %v625 = vpack.c.bf16 %v613, %v612
        %v626 = vpack.c.bf16 %v615, %v614
        %v627 = vpack.c.bf16 %v617, %v616
        %v628 = vpack.c.bf16 %v619, %v618
        %v629 = vpack.c.bf16 %v621, %v620
        %s630 = scalar_lea.vmem %s2, 64
        %v631 = vld [vmem:[%s630] sm:$0xf]
        %v632 = vld [vmem:[%s630 + $0x4] sm:$0xf]
        %v633 = vld [vmem:[%s630 + $0x8] sm:$0xf]
        %v634 = vld [vmem:[%s630 + $0xc] sm:$0xf]
        %v635 = vld [vmem:[%s630 + $0x10] sm:$0xf]
        %v636 = vld [vmem:[%s630 + $0x14] sm:$0xf]
        %v637 = vld [vmem:[%s630 + $0x18] sm:$0xf]
        %v638 = vld [vmem:[%s630 + $0x1c] sm:$0xf]
        %v639 = vld [vmem:[%s630 + $0x20] sm:$0xf]
        %v640 = vld [vmem:[%s630 + $0x24] sm:$0xf]
        %v641 = vld [vmem:[%s630 + $0x28] sm:$0xf]
        %v642 = vld [vmem:[%s630 + $0x2c] sm:$0xf]
        %v643 = vld [vmem:[%s630 + $0x30] sm:$0xf]
        %v644 = vld [vmem:[%s630 + $0x34] sm:$0xf]
        %v645 = vld [vmem:[%s630 + $0x38] sm:$0xf]
        %v646 = vld [vmem:[%s630 + $0x3c] sm:$0xf]
        %v647 = vld [vmem:[%s3 + $0x2] sm:$0x1]
        %v648 = vlaneseq
        %v649 = vshrl.u32 %v648, 7
        %v650 = vsub.s32 0, %v649
        %v651 = vrot.slane %v647, %v650
        %v668 = vunpack.c.l.b16 %v631
        %v669 = vunpack.c.l.b16 %v632
        %v670 = vunpack.c.l.b16 %v633
        %v671 = vunpack.c.l.b16 %v634
        %v672 = vunpack.c.l.b16 %v635
        %v673 = vunpack.c.l.b16 %v636
        %v674 = vunpack.c.l.b16 %v637
        %v675 = vunpack.c.l.b16 %v638
        %v676 = vunpack.c.l.b16 %v639
        %v677 = vunpack.c.l.b16 %v640
        %v678 = vunpack.c.l.b16 %v641
        %v679 = vunpack.c.l.b16 %v642
        %v680 = vunpack.c.l.b16 %v643
        %v681 = vunpack.c.l.b16 %v644
        %v682 = vunpack.c.l.b16 %v645
        %v683 = vunpack.c.l.b16 %v646
        %v684 = vpack.c.b16 %v669, %v668
        %v685 = vpack.c.b16 %v671, %v670
        %v686 = vpack.c.b16 %v673, %v672
        %v687 = vpack.c.b16 %v675, %v674
        %v688 = vpack.c.b16 %v677, %v676
        %v689 = vpack.c.b16 %v679, %v678
        %v690 = vpack.c.b16 %v681, %v680
        %v691 = vpack.c.b16 %v683, %v682
        %700 = vmatprep.subr.bf16.mxu0 0
        %701 = vmatpush1.bf16.msra.mxu0 %v684
        %702 = vmatprep.subr.bf16.mxu0 0
        %703 = vmatpush1.bf16.msra.mxu0 %v685
        %704 = vmatprep.subr.bf16.mxu0 0
        %705 = vmatpush1.bf16.msra.mxu0 %v686
        %706 = vmatprep.subr.bf16.mxu0 0
        %707 = vmatpush1.bf16.msra.mxu0 %v687
        %708 = vmatprep.subr.bf16.mxu0 0
        %709 = vmatpush1.bf16.msra.mxu0 %v688
        %710 = vmatprep.subr.bf16.mxu0 0
        %711 = vmatpush1.bf16.msra.mxu0 %v689
        %712 = vmatprep.subr.bf16.mxu0 0
        %713 = vmatpush1.bf16.msra.mxu0 %v690
        %714 = vmatprep.subr.bf16.mxu0 0
        %715 = vmatpush1.bf16.msra.mxu0 %v691
        %716 = vmatprep.subr.bf16.mxu0 0
        %717 = vmatpush1.bf16.msra.mxu0 0
        %718 = vmatprep.subr.bf16.mxu0 0
        %719 = vmatpush1.bf16.msra.mxu0 0
        %720 = vmatprep.subr.bf16.mxu0 0
        %721 = vmatpush1.bf16.msra.mxu0 0
        %722 = vmatprep.subr.bf16.mxu0 0
        %723 = vmatpush1.bf16.msra.mxu0 0
        %724 = vmatprep.subr.bf16.mxu0 0
        %725 = vmatpush1.bf16.msra.mxu0 0
        %726 = vmatprep.subr.bf16.mxu0 0
        %727 = vmatpush1.bf16.msra.mxu0 0
        %728 = vmatprep.subr.bf16.mxu0 0
        %729 = vmatpush1.bf16.msra.mxu0 0
        %730 = vmatprep.subr.bf16.mxu0 0
        %731 = vmatpush1.bf16.msra.mxu0 0
        %732 = vmatprep.mubr.bf16.mxu0 0
        %733 = vmatmul.mubr.bf16.gmra.mrb[0].mxu0 %v622
        %v734 = vpop.f32.mrb[0].mxu0
        %v735 = vadd.f32 %v651, %v734
        %v736 = vpop.f32.mrb[0].mxu0
        %v737 = vpop.f32.mrb[0].mxu0
        %v738 = vadd.f32 %v651, %v737
        %v739 = vpop.f32.mrb[0].mxu0
        %740 = vmatprep.mubr.bf16.mxu0 0
        %741 = vmatmul.mubr.bf16.gmra.mrb[0].mxu0 %v623
        %v742 = vpop.f32.mrb[0].mxu0
        %v743 = vadd.f32 %v651, %v742
        %v744 = vpop.f32.mrb[0].mxu0
        %v745 = vpop.f32.mrb[0].mxu0
        %v746 = vadd.f32 %v651, %v745
        %v747 = vpop.f32.mrb[0].mxu0
        %748 = vmatprep.mubr.bf16.mxu0 0
        %749 = vmatmul.mubr.bf16.gmra.mrb[0].mxu0 %v624
        %v750 = vpop.f32.mrb[0].mxu0
        %v751 = vadd.f32 %v651, %v750
        %v752 = vpop.f32.mrb[0].mxu0
        %v753 = vpop.f32.mrb[0].mxu0
        %v754 = vadd.f32 %v651, %v753
        %v755 = vpop.f32.mrb[0].mxu0
        %756 = vmatprep.mubr.bf16.mxu0 0
        %757 = vmatmul.mubr.bf16.gmra.mrb[0].mxu0 %v625
        %v758 = vpop.f32.mrb[0].mxu0
        %v759 = vadd.f32 %v651, %v758
        %v760 = vpop.f32.mrb[0].mxu0
        %v761 = vpop.f32.mrb[0].mxu0
        %v762 = vadd.f32 %v651, %v761
        %v763 = vpop.f32.mrb[0].mxu0
        %764 = vmatprep.mubr.bf16.mxu0 0
        %765 = vmatmul.mubr.bf16.gmra.mrb[0].mxu0 %v626
        %v766 = vpop.f32.mrb[0].mxu0
        %v767 = vadd.f32 %v651, %v766
        %v768 = vpop.f32.mrb[0].mxu0
        %v769 = vpop.f32.mrb[0].mxu0
        %v770 = vadd.f32 %v651, %v769
        %v771 = vpop.f32.mrb[0].mxu0
        %772 = vmatprep.mubr.bf16.mxu0 0
        %773 = vmatmul.mubr.bf16.gmra.mrb[0].mxu0 %v627
        %v774 = vpop.f32.mrb[0].mxu0
        %v775 = vadd.f32 %v651, %v774
        %v776 = vpop.f32.mrb[0].mxu0
        %v777 = vpop.f32.mrb[0].mxu0
        %v778 = vadd.f32 %v651, %v777
        %v779 = vpop.f32.mrb[0].mxu0
        %780 = vmatprep.mubr.bf16.mxu0 0
        %781 = vmatmul.mubr.bf16.gmra.mrb[0].mxu0 %v628
        %v782 = vpop.f32.mrb[0].mxu0
        %v783 = vadd.f32 %v651, %v782
        %v784 = vpop.f32.mrb[0].mxu0
        %v785 = vpop.f32.mrb[0].mxu0
        %v786 = vadd.f32 %v651, %v785
        %v787 = vpop.f32.mrb[0].mxu0
        %788 = vmatprep.mubr.bf16.mxu0 0
        %789 = vmatmul.mubr.bf16.gmra.mrb[0].mxu0 %v629
        %v790 = vpop.f32.mrb[0].mxu0
        %v791 = vadd.f32 %v651, %v790
        %v792 = vpop.f32.mrb[0].mxu0
        %v793 = vpop.f32.mrb[0].mxu0
        %v794 = vadd.f32 %v651, %v793
        %v795 = vpop.f32.mrb[0].mxu0
        %796 = vdwg.mxu0
        %v797 = vmax.f32 %v735, 0.0
        %v798 = vmax.f32 %v738, 0.0
        %v799 = vmax.f32 %v743, 0.0
        %v800 = vmax.f32 %v746, 0.0
        %v801 = vmax.f32 %v751, 0.0
        %v802 = vmax.f32 %v754, 0.0
        %v803 = vmax.f32 %v759, 0.0
        %v804 = vmax.f32 %v762, 0.0
        %v805 = vmax.f32 %v767, 0.0
        %v806 = vmax.f32 %v770, 0.0
        %v807 = vmax.f32 %v775, 0.0
        %v808 = vmax.f32 %v778, 0.0
        %v809 = vmax.f32 %v783, 0.0
        %v810 = vmax.f32 %v786, 0.0
        %v811 = vmax.f32 %v791, 0.0
        %v812 = vmax.f32 %v794, 0.0
        %v813 = vpack.c.bf16 %v798, %v797
        %v814 = vpack.c.bf16 %v800, %v799
        %v815 = vpack.c.bf16 %v802, %v801
        %v816 = vpack.c.bf16 %v804, %v803
        %v817 = vpack.c.bf16 %v806, %v805
        %v818 = vpack.c.bf16 %v808, %v807
        %v819 = vpack.c.bf16 %v810, %v809
        %v820 = vpack.c.bf16 %v812, %v811
        %s821 = scalar_lea.vmem %s2, 128
        %v822 = vld [vmem:[%s821] sm:$0xf]
        %v823 = vld [vmem:[%s821 + $0x4] sm:$0xf]
        %v824 = vld [vmem:[%s821 + $0x8] sm:$0xf]
        %v825 = vld [vmem:[%s821 + $0xc] sm:$0xf]
        %v826 = vld [vmem:[%s821 + $0x10] sm:$0xf]
        %v827 = vld [vmem:[%s821 + $0x14] sm:$0xf]
        %v828 = vld [vmem:[%s821 + $0x18] sm:$0xf]
        %v829 = vld [vmem:[%s821 + $0x1c] sm:$0xf]
        %v830 = vld [vmem:[%s821 + $0x20] sm:$0xf]
        %v831 = vld [vmem:[%s821 + $0x24] sm:$0xf]
        %v832 = vld [vmem:[%s821 + $0x28] sm:$0xf]
        %v833 = vld [vmem:[%s821 + $0x2c] sm:$0xf]
        %v834 = vld [vmem:[%s821 + $0x30] sm:$0xf]
        %v835 = vld [vmem:[%s821 + $0x34] sm:$0xf]
        %v836 = vld [vmem:[%s821 + $0x38] sm:$0xf]
        %v837 = vld [vmem:[%s821 + $0x3c] sm:$0xf]
        %v838 = vld [vmem:[%s3 + $0x3] sm:$0x1]
        %v839 = vlaneseq
        %v840 = vshrl.u32 %v839, 7
        %v841 = vsub.s32 0, %v840
        %v842 = vrot.slane %v838, %v841
        %v859 = vunpack.c.l.b16 %v822
        %v860 = vunpack.c.l.b16 %v823
        %v861 = vunpack.c.l.b16 %v824
        %v862 = vunpack.c.l.b16 %v825
        %v863 = vunpack.c.l.b16 %v826
        %v864 = vunpack.c.l.b16 %v827
        %v865 = vunpack.c.l.b16 %v828
        %v866 = vunpack.c.l.b16 %v829
        %v867 = vunpack.c.l.b16 %v830
        %v868 = vunpack.c.l.b16 %v831
        %v869 = vunpack.c.l.b16 %v832
        %v870 = vunpack.c.l.b16 %v833
        %v871 = vunpack.c.l.b16 %v834
        %v872 = vunpack.c.l.b16 %v835
        %v873 = vunpack.c.l.b16 %v836
        %v874 = vunpack.c.l.b16 %v837
        %v875 = vpack.c.b16 %v860, %v859
        %v876 = vpack.c.b16 %v862, %v861
        %v877 = vpack.c.b16 %v864, %v863
        %v878 = vpack.c.b16 %v866, %v865
        %v879 = vpack.c.b16 %v868, %v867
        %v880 = vpack.c.b16 %v870, %v869
        %v881 = vpack.c.b16 %v872, %v871
        %v882 = vpack.c.b16 %v874, %v873
        %891 = vmatprep.subr.bf16.mxu0 0
        %892 = vmatpush1.bf16.msra.mxu0 %v875
        %893 = vmatprep.subr.bf16.mxu0 0
        %894 = vmatpush1.bf16.msra.mxu0 %v876
        %895 = vmatprep.subr.bf16.mxu0 0
        %896 = vmatpush1.bf16.msra.mxu0 %v877
        %897 = vmatprep.subr.bf16.mxu0 0
        %898 = vmatpush1.bf16.msra.mxu0 %v878
        %899 = vmatprep.subr.bf16.mxu0 0
        %900 = vmatpush1.bf16.msra.mxu0 %v879
        %901 = vmatprep.subr.bf16.mxu0 0
        %902 = vmatpush1.bf16.msra.mxu0 %v880
        %903 = vmatprep.subr.bf16.mxu0 0
        %904 = vmatpush1.bf16.msra.mxu0 %v881
        %905 = vmatprep.subr.bf16.mxu0 0
        %906 = vmatpush1.bf16.msra.mxu0 %v882
        %907 = vmatprep.subr.bf16.mxu0 0
        %908 = vmatpush1.bf16.msra.mxu0 0
        %909 = vmatprep.subr.bf16.mxu0 0
        %910 = vmatpush1.bf16.msra.mxu0 0
        %911 = vmatprep.subr.bf16.mxu0 0
        %912 = vmatpush1.bf16.msra.mxu0 0
        %913 = vmatprep.subr.bf16.mxu0 0
        %914 = vmatpush1.bf16.msra.mxu0 0
        %915 = vmatprep.subr.bf16.mxu0 0
        %916 = vmatpush1.bf16.msra.mxu0 0
        %917 = vmatprep.subr.bf16.mxu0 0
        %918 = vmatpush1.bf16.msra.mxu0 0
        %919 = vmatprep.subr.bf16.mxu0 0
        %920 = vmatpush1.bf16.msra.mxu0 0
        %921 = vmatprep.subr.bf16.mxu0 0
        %922 = vmatpush1.bf16.msra.mxu0 0
        %923 = vmatprep.mubr.bf16.mxu0 0
        %924 = vmatmul.mubr.bf16.gmra.mrb[0].mxu0 %v813
        %v925 = vpop.f32.mrb[0].mxu0
        %v926 = vadd.f32 %v842, %v925
        %v927 = vpop.f32.mrb[0].mxu0
        %v928 = vpop.f32.mrb[0].mxu0
        %v929 = vadd.f32 %v842, %v928
        %v930 = vpop.f32.mrb[0].mxu0
        %931 = vmatprep.mubr.bf16.mxu0 0
        %932 = vmatmul.mubr.bf16.gmra.mrb[0].mxu0 %v814
        %v933 = vpop.f32.mrb[0].mxu0
        %v934 = vadd.f32 %v842, %v933
        %v935 = vpop.f32.mrb[0].mxu0
        %v936 = vpop.f32.mrb[0].mxu0
        %v937 = vadd.f32 %v842, %v936
        %v938 = vpop.f32.mrb[0].mxu0
        %939 = vmatprep.mubr.bf16.mxu0 0
        %940 = vmatmul.mubr.bf16.gmra.mrb[0].mxu0 %v815
        %v941 = vpop.f32.mrb[0].mxu0
        %v942 = vadd.f32 %v842, %v941
        %v943 = vpop.f32.mrb[0].mxu0
        %v944 = vpop.f32.mrb[0].mxu0
        %v945 = vadd.f32 %v842, %v944
        %v946 = vpop.f32.mrb[0].mxu0
        %947 = vmatprep.mubr.bf16.mxu0 0
        %948 = vmatmul.mubr.bf16.gmra.mrb[0].mxu0 %v816
        %v949 = vpop.f32.mrb[0].mxu0
        %v950 = vadd.f32 %v842, %v949
        %v951 = vpop.f32.mrb[0].mxu0
        %v952 = vpop.f32.mrb[0].mxu0
        %v953 = vadd.f32 %v842, %v952
        %v954 = vpop.f32.mrb[0].mxu0
        %955 = vmatprep.mubr.bf16.mxu0 0
        %956 = vmatmul.mubr.bf16.gmra.mrb[0].mxu0 %v817
        %v957 = vpop.f32.mrb[0].mxu0
        %v958 = vadd.f32 %v842, %v957
        %v959 = vpop.f32.mrb[0].mxu0
        %v960 = vpop.f32.mrb[0].mxu0
        %v961 = vadd.f32 %v842, %v960
        %v962 = vpop.f32.mrb[0].mxu0
        %963 = vmatprep.mubr.bf16.mxu0 0
        %964 = vmatmul.mubr.bf16.gmra.mrb[0].mxu0 %v818
        %v965 = vpop.f32.mrb[0].mxu0
        %v966 = vadd.f32 %v842, %v965
        %v967 = vpop.f32.mrb[0].mxu0
        %v968 = vpop.f32.mrb[0].mxu0
        %v969 = vadd.f32 %v842, %v968
        %v970 = vpop.f32.mrb[0].mxu0
        %971 = vmatprep.mubr.bf16.mxu0 0
        %972 = vmatmul.mubr.bf16.gmra.mrb[0].mxu0 %v819
        %v973 = vpop.f32.mrb[0].mxu0
        %v974 = vadd.f32 %v842, %v973
        %v975 = vpop.f32.mrb[0].mxu0
        %v976 = vpop.f32.mrb[0].mxu0
        %v977 = vadd.f32 %v842, %v976
        %v978 = vpop.f32.mrb[0].mxu0
        %979 = vmatprep.mubr.bf16.mxu0 0
        %980 = vmatmul.mubr.bf16.gmra.mrb[0].mxu0 %v820
        %v981 = vpop.f32.mrb[0].mxu0
        %v982 = vadd.f32 %v842, %v981
        %v983 = vpop.f32.mrb[0].mxu0
        %v984 = vpop.f32.mrb[0].mxu0
        %v985 = vadd.f32 %v842, %v984
        %v986 = vpop.f32.mrb[0].mxu0
        %987 = vdwg.mxu0
        %v988 = vmax.f32 %v926, 0.0
        %v989 = vmax.f32 %v929, 0.0
        %v990 = vmax.f32 %v934, 0.0
        %v991 = vmax.f32 %v937, 0.0
        %v992 = vmax.f32 %v942, 0.0
        %v993 = vmax.f32 %v945, 0.0
        %v994 = vmax.f32 %v950, 0.0
        %v995 = vmax.f32 %v953, 0.0
        %v996 = vmax.f32 %v958, 0.0
        %v997 = vmax.f32 %v961, 0.0
        %v998 = vmax.f32 %v966, 0.0
        %v999 = vmax.f32 %v969, 0.0
        %v1000 = vmax.f32 %v974, 0.0
        %v1001 = vmax.f32 %v977, 0.0
        %v1002 = vmax.f32 %v982, 0.0
        %v1003 = vmax.f32 %v985, 0.0
        %v1004 = vpack.c.bf16 %v989, %v988
        %v1005 = vpack.c.bf16 %v991, %v990
        %v1006 = vpack.c.bf16 %v993, %v992
        %v1007 = vpack.c.bf16 %v995, %v994
        %v1008 = vpack.c.bf16 %v997, %v996
        %v1009 = vpack.c.bf16 %v999, %v998
        %v1010 = vpack.c.bf16 %v1001, %v1000
        %v1011 = vpack.c.bf16 %v1003, %v1002
        %s1012 = scalar_lea.vmem %s2, 192
        %v1013 = vld [vmem:[%s1012] sm:$0xf]
        %v1014 = vld [vmem:[%s1012 + $0x4] sm:$0xf]
        %v1015 = vld [vmem:[%s1012 + $0x8] sm:$0xf]
        %v1016 = vld [vmem:[%s1012 + $0xc] sm:$0xf]
        %v1017 = vld [vmem:[%s1012 + $0x10] sm:$0xf]
        %v1018 = vld [vmem:[%s1012 + $0x14] sm:$0xf]
        %v1019 = vld [vmem:[%s1012 + $0x18] sm:$0xf]
        %v1020 = vld [vmem:[%s1012 + $0x1c] sm:$0xf]
        %v1021 = vld [vmem:[%s1012 + $0x20] sm:$0xf]
        %v1022 = vld [vmem:[%s1012 + $0x24] sm:$0xf]
        %v1023 = vld [vmem:[%s1012 + $0x28] sm:$0xf]
        %v1024 = vld [vmem:[%s1012 + $0x2c] sm:$0xf]
        %v1025 = vld [vmem:[%s1012 + $0x30] sm:$0xf]
        %v1026 = vld [vmem:[%s1012 + $0x34] sm:$0xf]
        %v1027 = vld [vmem:[%s1012 + $0x38] sm:$0xf]
        %v1028 = vld [vmem:[%s1012 + $0x3c] sm:$0xf]
        %v1029 = vld [vmem:[%s3 + $0x4] sm:$0x1]
        %v1030 = vlaneseq
        %v1031 = vshrl.u32 %v1030, 7
        %v1032 = vsub.s32 0, %v1031
        %v1033 = vrot.slane %v1029, %v1032
        %v1050 = vunpack.c.l.b16 %v1013
        %v1051 = vunpack.c.l.b16 %v1014
        %v1052 = vunpack.c.l.b16 %v1015
        %v1053 = vunpack.c.l.b16 %v1016
        %v1054 = vunpack.c.l.b16 %v1017
        %v1055 = vunpack.c.l.b16 %v1018
        %v1056 = vunpack.c.l.b16 %v1019
        %v1057 = vunpack.c.l.b16 %v1020
        %v1058 = vunpack.c.l.b16 %v1021
        %v1059 = vunpack.c.l.b16 %v1022
        %v1060 = vunpack.c.l.b16 %v1023
        %v1061 = vunpack.c.l.b16 %v1024
        %v1062 = vunpack.c.l.b16 %v1025
        %v1063 = vunpack.c.l.b16 %v1026
        %v1064 = vunpack.c.l.b16 %v1027
        %v1065 = vunpack.c.l.b16 %v1028
        %v1066 = vpack.c.b16 %v1051, %v1050
        %v1067 = vpack.c.b16 %v1053, %v1052
        %v1068 = vpack.c.b16 %v1055, %v1054
        %v1069 = vpack.c.b16 %v1057, %v1056
        %v1070 = vpack.c.b16 %v1059, %v1058
        %v1071 = vpack.c.b16 %v1061, %v1060
        %v1072 = vpack.c.b16 %v1063, %v1062
        %v1073 = vpack.c.b16 %v1065, %v1064
        %1082 = vmatprep.subr.bf16.mxu0 0
        %1083 = vmatpush1.bf16.msra.mxu0 %v1066
        %1084 = vmatprep.subr.bf16.mxu0 0
        %1085 = vmatpush1.bf16.msra.mxu0 %v1067
        %1086 = vmatprep.subr.bf16.mxu0 0
        %1087 = vmatpush1.bf16.msra.mxu0 %v1068
        %1088 = vmatprep.subr.bf16.mxu0 0
        %1089 = vmatpush1.bf16.msra.mxu0 %v1069
        %1090 = vmatprep.subr.bf16.mxu0 0
        %1091 = vmatpush1.bf16.msra.mxu0 %v1070
        %1092 = vmatprep.subr.bf16.mxu0 0
        %1093 = vmatpush1.bf16.msra.mxu0 %v1071
        %1094 = vmatprep.subr.bf16.mxu0 0
        %1095 = vmatpush1.bf16.msra.mxu0 %v1072
        %1096 = vmatprep.subr.bf16.mxu0 0
        %1097 = vmatpush1.bf16.msra.mxu0 %v1073
        %1098 = vmatprep.subr.bf16.mxu0 0
        %1099 = vmatpush1.bf16.msra.mxu0 0
        %1100 = vmatprep.subr.bf16.mxu0 0
        %1101 = vmatpush1.bf16.msra.mxu0 0
        %1102 = vmatprep.subr.bf16.mxu0 0
        %1103 = vmatpush1.bf16.msra.mxu0 0
        %1104 = vmatprep.subr.bf16.mxu0 0
        %1105 = vmatpush1.bf16.msra.mxu0 0
        %1106 = vmatprep.subr.bf16.mxu0 0
        %1107 = vmatpush1.bf16.msra.mxu0 0
        %1108 = vmatprep.subr.bf16.mxu0 0
        %1109 = vmatpush1.bf16.msra.mxu0 0
        %1110 = vmatprep.subr.bf16.mxu0 0
        %1111 = vmatpush1.bf16.msra.mxu0 0
        %1112 = vmatprep.subr.bf16.mxu0 0
        %1113 = vmatpush1.bf16.msra.mxu0 0
        %1114 = vmatprep.mubr.bf16.mxu0 0
        %1115 = vmatmul.mubr.bf16.gmra.mrb[0].mxu0 %v1004
        %v1116 = vpop.f32.mrb[0].mxu0
        %v1117 = vadd.f32 %v1033, %v1116
        %v1118 = vpop.f32.mrb[0].mxu0
        %v1119 = vpop.f32.mrb[0].mxu0
        %v1120 = vadd.f32 %v1033, %v1119
        %v1121 = vpop.f32.mrb[0].mxu0
        %1122 = vmatprep.mubr.bf16.mxu0 0
        %1123 = vmatmul.mubr.bf16.gmra.mrb[0].mxu0 %v1005
        %v1124 = vpop.f32.mrb[0].mxu0
        %v1125 = vadd.f32 %v1033, %v1124
        %v1126 = vpop.f32.mrb[0].mxu0
        %v1127 = vpop.f32.mrb[0].mxu0
        %v1128 = vadd.f32 %v1033, %v1127
        %v1129 = vpop.f32.mrb[0].mxu0
        %1130 = vmatprep.mubr.bf16.mxu0 0
        %1131 = vmatmul.mubr.bf16.gmra.mrb[0].mxu0 %v1006
        %v1132 = vpop.f32.mrb[0].mxu0
        %v1133 = vadd.f32 %v1033, %v1132
        %v1134 = vpop.f32.mrb[0].mxu0
        %v1135 = vpop.f32.mrb[0].mxu0
        %v1136 = vadd.f32 %v1033, %v1135
        %v1137 = vpop.f32.mrb[0].mxu0
        %1138 = vmatprep.mubr.bf16.mxu0 0
        %1139 = vmatmul.mubr.bf16.gmra.mrb[0].mxu0 %v1007
        %v1140 = vpop.f32.mrb[0].mxu0
        %v1141 = vadd.f32 %v1033, %v1140
        %v1142 = vpop.f32.mrb[0].mxu0
        %v1143 = vpop.f32.mrb[0].mxu0
        %v1144 = vadd.f32 %v1033, %v1143
        %v1145 = vpop.f32.mrb[0].mxu0
        %1146 = vmatprep.mubr.bf16.mxu0 0
        %1147 = vmatmul.mubr.bf16.gmra.mrb[0].mxu0 %v1008
        %v1148 = vpop.f32.mrb[0].mxu0
        %v1149 = vadd.f32 %v1033, %v1148
        %v1150 = vpop.f32.mrb[0].mxu0
        %v1151 = vpop.f32.mrb[0].mxu0
        %v1152 = vadd.f32 %v1033, %v1151
        %v1153 = vpop.f32.mrb[0].mxu0
        %1154 = vmatprep.mubr.bf16.mxu0 0
        %1155 = vmatmul.mubr.bf16.gmra.mrb[0].mxu0 %v1009
        %v1156 = vpop.f32.mrb[0].mxu0
        %v1157 = vadd.f32 %v1033, %v1156
        %v1158 = vpop.f32.mrb[0].mxu0
        %v1159 = vpop.f32.mrb[0].mxu0
        %v1160 = vadd.f32 %v1033, %v1159
        %v1161 = vpop.f32.mrb[0].mxu0
        %1162 = vmatprep.mubr.bf16.mxu0 0
        %1163 = vmatmul.mubr.bf16.gmra.mrb[0].mxu0 %v1010
        %v1164 = vpop.f32.mrb[0].mxu0
        %v1165 = vadd.f32 %v1033, %v1164
        %v1166 = vpop.f32.mrb[0].mxu0
        %v1167 = vpop.f32.mrb[0].mxu0
        %v1168 = vadd.f32 %v1033, %v1167
        %v1169 = vpop.f32.mrb[0].mxu0
        %1170 = vmatprep.mubr.bf16.mxu0 0
        %1171 = vmatmul.mubr.bf16.gmra.mrb[0].mxu0 %v1011
        %v1172 = vpop.f32.mrb[0].mxu0
        %v1173 = vadd.f32 %v1033, %v1172
        %v1174 = vpop.f32.mrb[0].mxu0
        %v1175 = vpop.f32.mrb[0].mxu0
        %v1176 = vadd.f32 %v1033, %v1175
        %v1177 = vpop.f32.mrb[0].mxu0
        %1178 = vdwg.mxu0
        %1179 = vmax.xlane.f32.xlu0 %v1117
        %v1180 = vpop.xlane.xlu0 %1179
        %1181 = vmax.xlane.f32.xlu0 %v1120
        %v1182 = vpop.xlane.xlu0 %1181
        %1183 = vmax.xlane.f32.xlu0 %v1125
        %v1184 = vpop.xlane.xlu0 %1183
        %1185 = vmax.xlane.f32.xlu0 %v1128
        %v1186 = vpop.xlane.xlu0 %1185
        %1187 = vmax.xlane.f32.xlu0 %v1133
        %v1188 = vpop.xlane.xlu0 %1187
        %1189 = vmax.xlane.f32.xlu0 %v1136
        %v1190 = vpop.xlane.xlu0 %1189
        %1191 = vmax.xlane.f32.xlu0 %v1141
        %v1192 = vpop.xlane.xlu0 %1191
        %1193 = vmax.xlane.f32.xlu0 %v1144
        %v1194 = vpop.xlane.xlu0 %1193
        %1195 = vmax.xlane.f32.xlu0 %v1149
        %v1196 = vpop.xlane.xlu0 %1195
        %1197 = vmax.xlane.f32.xlu0 %v1152
        %v1198 = vpop.xlane.xlu0 %1197
        %1199 = vmax.xlane.f32.xlu0 %v1157
        %v1200 = vpop.xlane.xlu0 %1199
        %1201 = vmax.xlane.f32.xlu0 %v1160
        %v1202 = vpop.xlane.xlu0 %1201
        %1203 = vmax.xlane.f32.xlu0 %v1165
        %v1204 = vpop.xlane.xlu0 %1203
        %1205 = vmax.xlane.f32.xlu0 %v1168
        %v1206 = vpop.xlane.xlu0 %1205
        %1207 = vmax.xlane.f32.xlu0 %v1173
        %v1208 = vpop.xlane.xlu0 %1207
        %1209 = vmax.xlane.f32.xlu0 %v1176
        %v1210 = vpop.xlane.xlu0 %1209
        %v1211 = vsub.f32 %v1117, %v1180
        %v1212 = vsub.f32 %v1120, %v1182
        %v1213 = vsub.f32 %v1125, %v1184
        %v1214 = vsub.f32 %v1128, %v1186
        %v1215 = vsub.f32 %v1133, %v1188
        %v1216 = vsub.f32 %v1136, %v1190
        %v1217 = vsub.f32 %v1141, %v1192
        %v1218 = vsub.f32 %v1144, %v1194
        %v1219 = vsub.f32 %v1149, %v1196
        %v1220 = vsub.f32 %v1152, %v1198
        %v1221 = vsub.f32 %v1157, %v1200
        %v1222 = vsub.f32 %v1160, %v1202
        %v1223 = vsub.f32 %v1165, %v1204
        %v1224 = vsub.f32 %v1168, %v1206
        %v1225 = vsub.f32 %v1173, %v1208
        %v1226 = vsub.f32 %v1176, %v1210
        %v1227 = vmul.f32 %v1211, 1.442695
        %v1228 = vpow.pop %v1227
        %v1229 = vmul.f32 %v1212, 1.442695
        %v1230 = vpow.pop %v1229
        %v1231 = vmul.f32 %v1213, 1.442695
        %v1232 = vpow.pop %v1231
        %v1233 = vmul.f32 %v1214, 1.442695
        %v1234 = vpow.pop %v1233
        %v1235 = vmul.f32 %v1215, 1.442695
        %v1236 = vpow.pop %v1235
        %v1237 = vmul.f32 %v1216, 1.442695
        %v1238 = vpow.pop %v1237
        %v1239 = vmul.f32 %v1217, 1.442695
        %v1240 = vpow.pop %v1239
        %v1241 = vmul.f32 %v1218, 1.442695
        %v1242 = vpow.pop %v1241
        %v1243 = vmul.f32 %v1219, 1.442695
        %v1244 = vpow.pop %v1243
        %v1245 = vmul.f32 %v1220, 1.442695
        %v1246 = vpow.pop %v1245
        %v1247 = vmul.f32 %v1221, 1.442695
        %v1248 = vpow.pop %v1247
        %v1249 = vmul.f32 %v1222, 1.442695
        %v1250 = vpow.pop %v1249
        %v1251 = vmul.f32 %v1223, 1.442695
        %v1252 = vpow.pop %v1251
        %v1253 = vmul.f32 %v1224, 1.442695
        %v1254 = vpow.pop %v1253
        %v1255 = vmul.f32 %v1225, 1.442695
        %v1256 = vpow.pop %v1255
        %v1257 = vmul.f32 %v1226, 1.442695
        %v1258 = vpow.pop %v1257
        %1259 = vadd.xlane.f32.xlu0 %v1228
        %v1260 = vpop.xlane.xlu0 %1259
        %1261 = vadd.xlane.f32.xlu0 %v1230
        %v1262 = vpop.xlane.xlu0 %1261
        %1263 = vadd.xlane.f32.xlu0 %v1232
        %v1264 = vpop.xlane.xlu0 %1263
        %1265 = vadd.xlane.f32.xlu0 %v1234
        %v1266 = vpop.xlane.xlu0 %1265
        %1267 = vadd.xlane.f32.xlu0 %v1236
        %v1268 = vpop.xlane.xlu0 %1267
        %1269 = vadd.xlane.f32.xlu0 %v1238
        %v1270 = vpop.xlane.xlu0 %1269
        %1271 = vadd.xlane.f32.xlu0 %v1240
        %v1272 = vpop.xlane.xlu0 %1271
        %1273 = vadd.xlane.f32.xlu0 %v1242
        %v1274 = vpop.xlane.xlu0 %1273
        %1275 = vadd.xlane.f32.xlu0 %v1244
        %v1276 = vpop.xlane.xlu0 %1275
        %1277 = vadd.xlane.f32.xlu0 %v1246
        %v1278 = vpop.xlane.xlu0 %1277
        %1279 = vadd.xlane.f32.xlu0 %v1248
        %v1280 = vpop.xlane.xlu0 %1279
        %1281 = vadd.xlane.f32.xlu0 %v1250
        %v1282 = vpop.xlane.xlu0 %1281
        %1283 = vadd.xlane.f32.xlu0 %v1252
        %v1284 = vpop.xlane.xlu0 %1283
        %1285 = vadd.xlane.f32.xlu0 %v1254
        %v1286 = vpop.xlane.xlu0 %1285
        %1287 = vadd.xlane.f32.xlu0 %v1256
        %v1288 = vpop.xlane.xlu0 %1287
        %1289 = vadd.xlane.f32.xlu0 %v1258
        %v1290 = vpop.xlane.xlu0 %1289
        %v1291 = vlog2.pop %v1260
        %v1292 = vmul.f32 %v1291, 0.6931472
        %v1293 = vlog2.pop %v1262
        %v1294 = vmul.f32 %v1293, 0.6931472
        %v1295 = vlog2.pop %v1264
        %v1296 = vmul.f32 %v1295, 0.6931472
        %v1297 = vlog2.pop %v1266
        %v1298 = vmul.f32 %v1297, 0.6931472
        %v1299 = vlog2.pop %v1268
        %v1300 = vmul.f32 %v1299, 0.6931472
        %v1301 = vlog2.pop %v1270
        %v1302 = vmul.f32 %v1301, 0.6931472
        %v1303 = vlog2.pop %v1272
        %v1304 = vmul.f32 %v1303, 0.6931472
        %v1305 = vlog2.pop %v1274
        %v1306 = vmul.f32 %v1305, 0.6931472
        %v1307 = vlog2.pop %v1276
        %v1308 = vmul.f32 %v1307, 0.6931472
        %v1309 = vlog2.pop %v1278
        %v1310 = vmul.f32 %v1309, 0.6931472
        %v1311 = vlog2.pop %v1280
        %v1312 = vmul.f32 %v1311, 0.6931472
        %v1313 = vlog2.pop %v1282
        %v1314 = vmul.f32 %v1313, 0.6931472
        %v1315 = vlog2.pop %v1284
        %v1316 = vmul.f32 %v1315, 0.6931472
        %v1317 = vlog2.pop %v1286
        %v1318 = vmul.f32 %v1317, 0.6931472
        %v1319 = vlog2.pop %v1288
        %v1320 = vmul.f32 %v1319, 0.6931472
        %v1321 = vlog2.pop %v1290
        %v1322 = vmul.f32 %v1321, 0.6931472
        %v1323 = vsub.f32 %v1211, %v1292
        %v1324 = vsub.f32 %v1212, %v1294
        %v1325 = vsub.f32 %v1213, %v1296
        %v1326 = vsub.f32 %v1214, %v1298
        %v1327 = vsub.f32 %v1215, %v1300
        %v1328 = vsub.f32 %v1216, %v1302
        %v1329 = vsub.f32 %v1217, %v1304
        %v1330 = vsub.f32 %v1218, %v1306
        %v1331 = vsub.f32 %v1219, %v1308
        %v1332 = vsub.f32 %v1220, %v1310
        %v1333 = vsub.f32 %v1221, %v1312
        %v1334 = vsub.f32 %v1222, %v1314
        %v1335 = vsub.f32 %v1223, %v1316
        %v1336 = vsub.f32 %v1224, %v1318
        %v1337 = vsub.f32 %v1225, %v1320
        %v1338 = vsub.f32 %v1226, %v1322
        %v1339 = vpack.c.bf16 %v1324, %v1323
        %v1340 = vpack.c.bf16 %v1326, %v1325
        %v1341 = vpack.c.bf16 %v1328, %v1327
        %v1342 = vpack.c.bf16 %v1330, %v1329
        %v1343 = vpack.c.bf16 %v1332, %v1331
        %v1344 = vpack.c.bf16 %v1334, %v1333
        %v1345 = vpack.c.bf16 %v1336, %v1335
        %v1346 = vpack.c.bf16 %v1338, %v1337
        %v1355 = vunpack.c.l.b16 %v1339
        %v1356 = vunpack.c.h.b16 %v1339
        %v1357 = vunpack.c.l.b16 %v1340
        %v1358 = vunpack.c.h.b16 %v1340
        %v1359 = vunpack.c.l.b16 %v1341
        %v1360 = vunpack.c.h.b16 %v1341
        %v1361 = vunpack.c.l.b16 %v1342
        %v1362 = vunpack.c.h.b16 %v1342
        %v1363 = vunpack.c.l.b16 %v1343
        %v1364 = vunpack.c.h.b16 %v1343
        %v1365 = vunpack.c.l.b16 %v1344
        %v1366 = vunpack.c.h.b16 %v1344
        %v1367 = vunpack.c.l.b16 %v1345
        %v1368 = vunpack.c.h.b16 %v1345
        %v1369 = vunpack.c.l.b16 %v1346
        %v1370 = vunpack.c.h.b16 %v1346
        %v1371 = vpack.c.b16 %v1355, %v1355
        %v1372 = vpack.c.b16 %v1356, %v1356
        %v1373 = vpack.c.b16 %v1357, %v1357
        %v1374 = vpack.c.b16 %v1358, %v1358
        %v1375 = vpack.c.b16 %v1359, %v1359
        %v1376 = vpack.c.b16 %v1360, %v1360
        %v1377 = vpack.c.b16 %v1361, %v1361
        %v1378 = vpack.c.b16 %v1362, %v1362
        %v1379 = vpack.c.b16 %v1363, %v1363
        %v1380 = vpack.c.b16 %v1364, %v1364
        %v1381 = vpack.c.b16 %v1365, %v1365
        %v1382 = vpack.c.b16 %v1366, %v1366
        %v1383 = vpack.c.b16 %v1367, %v1367
        %v1384 = vpack.c.b16 %v1368, %v1368
        %v1385 = vpack.c.b16 %v1369, %v1369
        %v1386 = vpack.c.b16 %v1370, %v1370
        %1403 = vst [vmem:[%s214] sm:$0xf] %v1371
        %1404 = vst [vmem:[%s214 + $0x4] sm:$0xf] %v1372
        %1405 = vst [vmem:[%s214 + $0x8] sm:$0xf] %v1373
        %1406 = vst [vmem:[%s214 + $0xc] sm:$0xf] %v1374
        %1407 = vst [vmem:[%s214 + $0x10] sm:$0xf] %v1375
        %1408 = vst [vmem:[%s214 + $0x14] sm:$0xf] %v1376
        %1409 = vst [vmem:[%s214 + $0x18] sm:$0xf] %v1377
        %1410 = vst [vmem:[%s214 + $0x1c] sm:$0xf] %v1378
        %1411 = vst [vmem:[%s214 + $0x20] sm:$0xf] %v1379
        %1412 = vst [vmem:[%s214 + $0x24] sm:$0xf] %v1380
        %1413 = vst [vmem:[%s214 + $0x28] sm:$0xf] %v1381
        %1414 = vst [vmem:[%s214 + $0x2c] sm:$0xf] %v1382
        %1415 = vst [vmem:[%s214 + $0x30] sm:$0xf] %v1383
        %1416 = vst [vmem:[%s214 + $0x34] sm:$0xf] %v1384
        %1417 = vst [vmem:[%s214 + $0x38] sm:$0xf] %v1385
        %1418 = vst [vmem:[%s214 + $0x3c] sm:$0xf] %v1386
        %s1419 = smul.u32 16, %s16
        %p1420 = scmp.lt.s32.totalorder %s1419, 31
        %s1421 = scalar_select %p1420, %s1419, 31
        %s1422 = smul.addr %s1421, 4
        %s1423 = scalar_lea.vmem %s4, %s1422
        // Predicated region
        $region41: #{net_forward_pallas.1} parent=35 // pred_check
          %p1424 = pneg %p123
        $region42: #{net_forward_pallas.1} parent=35 // pred_check_branch
          %1426 = sbr.rel (%p1424) target = $region44
        $region43: #{net_forward_pallas.1} parent=35 // pred_region
          %s1427 = smul.u32 16, %s16
        $region44: #{net_forward_pallas.1} parent=35 // pred_fallthru
          _
      $region36: #{net_forward_pallas.1} parent=5 // pred_fallthru
        _
      %p1428 = scmp.le.s32.totalorder 2, %s11
      // Predicated region
      $region45: #{net_forward_pallas.1} parent=5 // pred_check
        %p1429 = pneg %p1428
      $region46: #{net_forward_pallas.1} parent=5 // pred_check_branch
        %1431 = sbr.rel (%p1429) target = $region48
      $region47: #{net_forward_pallas.1} parent=5 // pred_region
        %s1432 = ssub.s32 %s11, 2
        // Predicated region
        $region49: #{net_forward_pallas.1} parent=47 // pred_check
          %p1433 = pneg %p129
        $region50: #{net_forward_pallas.1} parent=47 // pred_check_branch
          %1435 = sbr.rel (%p1433) target = $region52
        $region51: #{net_forward_pallas.1} parent=47 // pred_region
          %s1436 = smul.u32 16, %s17
          %p1437 = scmp.lt.s32.totalorder %s1436, 31
          %s1438 = scalar_select %p1437, %s1436, 31
          %s1439 = smul.addr %s1438, 4
          %s1440 = scalar_lea.vmem %s4, %s1439
        $region52: #{net_forward_pallas.1} parent=47 // pred_fallthru
          _
      $region48: #{net_forward_pallas.1} parent=5 // pred_fallthru
        _
    $region6: #{net_forward_pallas.1} parent=1 // loop_footer
      %s15 = sadd.s32 1, %s11
    $region7: #{net_forward_pallas.1} parent=1 // loop_footer_branch
      %10 = sbr.rel target = $region3
    $region8: #{net_forward_pallas.1} parent=1 // loop_exit
      _
    %1441 = vsyncpa [#allocation3], 1
    %s1442 = scalar_lea.sflag [#allocation3], 1
    %1443 = vsyncpa %s1442, 1

</llo_original>
